<compile_context>
chip_gen: v7x
topology: tpu7x:2x2x1
jax: 0.10.0
libtpu: 0.0.40
codegen_flags: <defaults>
</compile_context>

<pallas_src>
import functools

import numpy as np
import jax
import jax.numpy as jnp
from jax.experimental import pallas as pl
from jax.experimental.pallas import tpu as pltpu  # noqa: F401  (TPU backend assumed)

# ---------------------------------------------------------------- config ----
B          = 2
C_IN       = 3
IMAGE_SIZE = 12                     # raw input H = W (before square padding)
IMG_SIZE   = 16                     # image_encoder.img_size (padded square)
PATCH      = 4
HP = WP    = IMG_SIZE // PATCH      # 4x4 token grid
TOK        = HP * WP                # 16 tokens per image
EMBED      = 32
LOWRES     = 8                      # LQ decoder mask resolution
HIGHRES    = 16                     # HQ decoder mask resolution
PATCH_DIM  = PATCH * PATCH * C_IN   # 48

PIXEL_MEAN = np.asarray([123.675, 116.28, 103.53], dtype=np.float32)
PIXEL_STD  = np.asarray([58.395, 57.12, 57.375], dtype=np.float32)


def _round_up(x, m):
    return (x + m - 1) // m * m


# -------------------------------------------------------------- parameters --
def init_params(key):
    ks = jax.random.split(key, 16)
    n = lambda k, shape: (0.02 * jax.random.normal(k, shape, jnp.float32))
    z = lambda shape: jnp.zeros(shape, jnp.float32)
    return {
        # image encoder (patch embed + neck)
        "patch_w": n(ks[0], (PATCH_DIM, EMBED)), "patch_b": z((EMBED,)),
        "neck_w":  n(ks[1], (EMBED, EMBED)),     "neck_b":  z((EMBED,)),
        # prompt encoder dense PE (random Fourier features)
        "pe_gauss": jax.random.normal(ks[2], (2, EMBED // 2), jnp.float32),
        # LQ mask decoder head
        "lq_w1": n(ks[3], (EMBED, EMBED)), "lq_b1": z((EMBED,)),
        "lq_w2": n(ks[4], (EMBED, 1)),     "lq_b2": z((1,)),
        # HQ mask decoder head
        "hq_interm_w": n(ks[5], (EMBED, EMBED)), "hq_interm_b": z((EMBED,)),
        "hq_mask_w":   n(ks[6], (1, EMBED)),     "hq_mask_b":   z((EMBED,)),
        "hq_w1": n(ks[7], (EMBED, EMBED)), "hq_b1": z((EMBED,)),
        "hq_w2": n(ks[8], (EMBED, 1)),     "hq_b2": z((1,)),
    }


# --------------------------------------------------- bilinear resize matrix --
def _bilinear_matrix(in_size, out_size):
    """1-D matrix matching F.interpolate(mode='bilinear', align_corners=False).
    Same-size in/out => exact identity."""
    i = np.arange(out_size, dtype=np.float64)
    src = np.maximum((i + 0.5) * (in_size / out_size) - 0.5, 0.0)
    i0 = np.floor(src).astype(np.int64)
    w1 = src - i0
    i0c = np.clip(i0, 0, in_size - 1)
    i1c = np.clip(i0 + 1, 0, in_size - 1)
    M = np.zeros((out_size, in_size), dtype=np.float64)
    M[np.arange(out_size), i0c] += 1.0 - w1
    M[np.arange(out_size), i1c] += w1
    return M


# ------------------------------------------------------- fused forward (jit) --
@functools.partial(jax.jit, static_argnames=("image_size",))
def _sam_forward(params, x_nchw, *, image_size):
    f32 = jnp.float32
    b = x_nchw.shape[0]

    # ---- trace-time numpy constants: bilinear resize / crop kron matrices ----
    up_lq = np.kron(_bilinear_matrix(HP, LOWRES),  _bilinear_matrix(WP, LOWRES))   # (64, 16)
    dn_hq = np.kron(_bilinear_matrix(LOWRES, HP),  _bilinear_matrix(LOWRES, WP))   # (16, 64)
    up_hq = np.kron(_bilinear_matrix(HP, HIGHRES), _bilinear_matrix(WP, HIGHRES))  # (256, 16)
    crop = np.eye(IMG_SIZE)[:image_size, :]                                        # (12, 16)
    # postprocess: resize(HIGH->IMG) [identity here] . crop . resize(in->orig) [identity]
    post1d = (_bilinear_matrix(image_size, image_size) @ crop
              @ _bilinear_matrix(HIGHRES, IMG_SIZE))                               # (12, 16)
    post = np.kron(post1d, post1d) @ up_hq                                         # (144, 16)
    eye_b = np.eye(b)
    k_lq   = np.kron(eye_b, up_lq.T)      # (b*TOK, b*64)
    k_ds   = np.kron(eye_b, dn_hq.T)      # (b*64, b*TOK)
    k_hq   = np.kron(eye_b, up_hq.T)      # (b*TOK, b*256)
    k_post = np.kron(eye_b, post.T)       # (b*TOK, b*img^2)
    k_lqds = np.asarray(k_lq @ k_ds, np.float32)   # precomposed 4x4->8x8->4x4 (b*TOK, b*TOK)

    n_low  = b * LOWRES * LOWRES
    n_high = b * HIGHRES * HIGHRES
    n_mask = b * image_size * image_size
    n_low_pad = _round_up(n_low, 128)
    n_hm_pad  = _round_up(n_high + n_mask, 128)
    n_out     = n_low_pad + n_hm_pad

    k_low = np.zeros((b * TOK, n_low_pad), np.float32)
    k_low[:, :n_low] = k_lq
    k_hm = np.zeros((b * TOK, n_hm_pad), np.float32)        # [ k_hq | k_post | 0-pad ]
    k_hm[:, :n_high] = k_hq
    k_hm[:, n_high:n_high + n_mask] = k_post
    k_low = jnp.asarray(k_low)
    k_hm = jnp.asarray(k_hm)
    k_lqds = jnp.asarray(k_lqds)

    # ---- parameter folding (tiny; fused by XLA with the rest of the program) ----
    # Fold (x - mean)/std into patch-embed weights; fold patch-embed (linear)
    # into the stacked [neck ; hq_interm] projection.
    std48  = jnp.asarray(np.tile(PIXEL_STD,  PATCH * PATCH), f32)
    mean48 = jnp.asarray(np.tile(PIXEL_MEAN, PATCH * PATCH), f32)
    pwT = (params["patch_w"] / std48[:, None]).T                                   # (E, 48)
    pb  = (params["patch_b"] - (mean48 / std48) @ params["patch_w"])[:, None]      # (E, 1)
    wa  = jnp.concatenate([params["neck_w"].T, params["hq_interm_w"].T], axis=0)   # (2E, E)
    ba  = jnp.concatenate([params["neck_b"], params["hq_interm_b"]])[:, None]      # (2E, 1)
    w_enc = wa @ pwT                                                               # (2E, 48)
    b_enc = wa @ pb + ba                                                           # (2E, 1)

    # dense positional encoding (input independent), feature-major, batch tiled
    ys = (jnp.arange(HP, dtype=f32) + 0.5) / HP
    xs = (jnp.arange(WP, dtype=f32) + 0.5) / WP
    gy, gx = jnp.meshgrid(ys, xs, indexing="ij")
    coords = 2.0 * jnp.stack([gy, gx], axis=-1).reshape(TOK, 2) - 1.0
    proj = 2.0 * jnp.pi * (coords @ params["pe_gauss"])
    pe = jnp.tile(jnp.concatenate([jnp.sin(proj), jnp.cos(proj)], axis=-1).T, (1, b))  # (E, b*TOK)

    lq1T, lq1b = params["lq_w1"].T, params["lq_b1"][:, None]
    lq2T, lq2b = params["lq_w2"].T, params["lq_b2"][:, None]
    hqmwT = params["hq_mask_w"].T                                                  # (E, 1)
    hq1T = params["hq_w1"].T
    hq1b = hq1T @ params["hq_mask_b"][:, None] + params["hq_b1"][:, None]          # fold mask-emb bias
    hq2T, hq2b = params["hq_w2"].T, params["hq_b2"][:, None]

    # ---- preprocess + patchify --------------------------------------------------
    # NCHW -> NHWC; pad bottom/right to IMG_SIZE with the per-channel pixel mean
    # so the folded normalization produces exactly 0 in the padded region.
    x_nhwc = jnp.transpose(x_nchw, (0, 2, 3, 1)).astype(f32)
    h, w = x_nhwc.shape[1], x_nhwc.shape[2]
    canvas = jnp.broadcast_to(
        jnp.asarray(PIXEL_MEAN, f32).reshape(1, 1, 1, C_IN),
        (b, IMG_SIZE, IMG_SIZE, C_IN))
    x_pad = canvas.at[:, :h, :w, :].set(x_nhwc)
    patches = (x_pad.reshape(b, HP, PATCH, WP, PATCH, C_IN)
                    .transpose(0, 1, 3, 2, 4, 5)
                    .reshape(b * TOK, PATCH_DIM)).T                                # (48, b*TOK)

    # ---- single fused grid-less Pallas kernel -----------------------------------
    def kernel(x_ref, w_enc_ref, b_enc_ref, pe_ref,
               lq1T_ref, lq1b_ref, lq2T_ref, lq2b_ref,
               hqmwT_ref, k_lqds_ref,
               hq1T_ref, hq1b_ref, hq2T_ref, hq2b_ref,
               k_low_ref, k_hm_ref, out_ref):
        # image encoder: (folded) patch embed + stacked [neck ; hq_interm], ReLU
        a = jnp.maximum(
            jnp.dot(w_enc_ref[...], x_ref[...], preferred_element_type=f32)
            + b_enc_ref[...], 0.0)
        src    = a[0:EMBED, :] + pe_ref[...]          # image embeddings + dense PE
        interm = a[EMBED:2 * EMBED, :]                # HQ projection of interm tokens

        # LQ mask decoder
        h_lq = jnp.maximum(
            jnp.dot(lq1T_ref[...], src, preferred_element_type=f32) + lq1b_ref[...], 0.0)
        m_lq = jnp.dot(lq2T_ref[...], h_lq, preferred_element_type=f32) + lq2b_ref[...]
        out_ref[:, 0:n_low_pad] = jnp.dot(m_lq, k_low_ref[...],
                                          preferred_element_type=f32)   # bilinear 4x4 -> 8x8

        # HQ mask decoder (8x8->4x4 downsample precomposed into k_lqds)
        mask_ds = jnp.dot(m_lq, k_lqds_ref[...], preferred_element_type=f32)
        fused = src + interm + hqmwT_ref[...] * mask_ds               # rank-1 mask embedding
        h_hq = jnp.maximum(
            jnp.dot(hq1T_ref[...], fused, preferred_element_type=f32) + hq1b_ref[...], 0.0)
        m_hq = jnp.dot(hq2T_ref[...], h_hq, preferred_element_type=f32) + hq2b_ref[...]
        # one lane-dense matmul producing [high-res logits | postprocessed masks | pad]
        out_ref[:, n_low_pad:n_out] = jnp.dot(m_hq, k_hm_ref[...],
                                              preferred_element_type=f32)

    out = pl.pallas_call(
        kernel,
        out_shape=jax.ShapeDtypeStruct((1, n_out), f32),
        cost_estimate=pl.CostEstimate(flops=420_000, transcendentals=0,
                                      bytes_accessed=200_000),
    )(patches, w_enc, b_enc, pe,
      lq1T, lq1b, lq2T, lq2b,
      hqmwT, k_lqds,
      hq1T, hq1b, hq2T, hq2b,
      k_low, k_hm)

    row = out[0]
    low_res_masks  = row[:n_low].reshape(b, 1, LOWRES, LOWRES)
    high_res_masks = row[n_low_pad:n_low_pad + n_high].reshape(b, 1, HIGHRES, HIGHRES)
    masks          = row[n_low_pad + n_high:n_low_pad + n_high + n_mask].reshape(
        b, 1, image_size, image_size)
    return masks, low_res_masks, high_res_masks


# ---------------------------------------------------------- public wrappers --
def sam_ms_forward_train(batched_input, image_size, params):
    masks, low_res_masks, high_res_masks = _sam_forward(
        params, batched_input, image_size=image_size)
    return {
        "masks": masks,
        "iou_predictions": None,
        "low_res_logits": low_res_masks,
        "high_res_logits_list": [high_res_masks],
    }


def sam_ms_forward(batched_input, multimask_output, image_size, params):
    if isinstance(batched_input, list):
        # TODO(synk): forward_test (list-of-dicts inference path) not implemented —
        # prompt-handling submodule definitions were not provided.
        raise NotImplementedError("forward_test (list input) not implemented")
    return sam_ms_forward_train(batched_input, image_size, params)


# -------------------------------------------------------------------- main --
if __name__ == "__main__":
    key = jax.random.PRNGKey(0)
    k_img, k_par = jax.random.split(key)
    # image batch in PyTorch NCHW convention, pixel values in [0, 255]
    x = jax.random.uniform(k_img, (B, C_IN, IMAGE_SIZE, IMAGE_SIZE),
                           dtype=jnp.float32) * 255.0
    params = init_params(k_par)

    out = sam_ms_forward(x, multimask_output=False,
                         image_size=IMAGE_SIZE, params=params)

    jax.block_until_ready(out["masks"])
    jax.block_until_ready(out["low_res_logits"])
    jax.block_until_ready(out["high_res_logits_list"][-1])

    assert out["masks"].shape == (B, 1, IMAGE_SIZE, IMAGE_SIZE)
    assert out["low_res_logits"].shape == (B, 1, LOWRES, LOWRES)
    assert out["high_res_logits_list"][-1].shape == (B, 1, HIGHRES, HIGHRES)
    assert bool(jnp.all(jnp.isfinite(out["masks"])))
    assert bool(jnp.all(jnp.isfinite(out["low_res_logits"])))
    assert bool(jnp.all(jnp.isfinite(out["high_res_logits_list"][-1])))
    print("KERNEL_OK")
</pallas_src>

<mosaic_0001>
module attributes {stable_mosaic.version = 11 : i64} {
  func.func @kernel(%arg0: memref<48x32xf32, #tpu.memory_space<vmem>>, %arg1: memref<64x48xf32, #tpu.memory_space<vmem>>, %arg2: memref<64x1xf32, #tpu.memory_space<vmem>>, %arg3: memref<32x32xf32, #tpu.memory_space<vmem>>, %arg4: memref<32x32xf32, #tpu.memory_space<vmem>>, %arg5: memref<32x1xf32, #tpu.memory_space<vmem>>, %arg6: memref<1x32xf32, #tpu.memory_space<vmem>>, %arg7: memref<1x1xf32, #tpu.memory_space<vmem>>, %arg8: memref<32x1xf32, #tpu.memory_space<vmem>>, %arg9: memref<32x32xf32, #tpu.memory_space<vmem>>, %arg10: memref<32x32xf32, #tpu.memory_space<vmem>>, %arg11: memref<32x1xf32, #tpu.memory_space<vmem>>, %arg12: memref<1x32xf32, #tpu.memory_space<vmem>>, %arg13: memref<1x1xf32, #tpu.memory_space<vmem>>, %arg14: memref<32x128xf32, #tpu.memory_space<vmem>>, %arg15: memref<32x896xf32, #tpu.memory_space<vmem>>, %arg16: memref<1x1024xf32, #tpu.memory_space<vmem>>) attributes {dimension_semantics = [], scalar_prefetch = 0 : i64, scratch_operands = 0 : i64, tpu.core_type = #tpu.core_type<tc>} {
    %c0 = arith.constant 0 : index
    %c0_0 = arith.constant 0 : index
    %0 = vector.load %arg1[%c0, %c0_0] : memref<64x48xf32, #tpu.memory_space<vmem>>, vector<64x48xf32>
    %c0_1 = arith.constant 0 : index
    %c0_2 = arith.constant 0 : index
    %1 = vector.load %arg0[%c0_1, %c0_2] : memref<48x32xf32, #tpu.memory_space<vmem>>, vector<48x32xf32>
    %cst = arith.constant dense<0.000000e+00> : vector<64x32xf32>
    %2 = tpu.matmul %0, %1, %cst {dimension_numbers = #tpu.dot_dimension_numbers<[1], [0], [0], [1], [0, 0, 1, 1], [], []>} : vector<64x48xf32>, vector<48x32xf32>, vector<64x32xf32> -> vector<64x32xf32>
    %c0_3 = arith.constant 0 : index
    %c0_4 = arith.constant 0 : index
    %3 = vector.load %arg2[%c0_3, %c0_4] : memref<64x1xf32, #tpu.memory_space<vmem>>, vector<64x1xf32>
    %4 = vector.broadcast %3 : vector<64x1xf32> to vector<64x32xf32>
    %5 = arith.addf %2, %4 : vector<64x32xf32>
    %cst_5 = arith.constant 0.000000e+00 : f32
    %6 = vector.broadcast %cst_5 : f32 to vector<64x32xf32>
    %7 = arith.maximumf %5, %6 : vector<64x32xf32>
    %8 = vector.extract_strided_slice %7 {offsets = [0, 0], sizes = [32, 32], strides = [1, 1]} : vector<64x32xf32> to vector<32x32xf32>
    %c0_6 = arith.constant 0 : index
    %c0_7 = arith.constant 0 : index
    %9 = vector.load %arg3[%c0_6, %c0_7] : memref<32x32xf32, #tpu.memory_space<vmem>>, vector<32x32xf32>
    %10 = arith.addf %8, %9 : vector<32x32xf32>
    %11 = vector.extract_strided_slice %7 {offsets = [32, 0], sizes = [32, 32], strides = [1, 1]} : vector<64x32xf32> to vector<32x32xf32>
    %c0_8 = arith.constant 0 : index
    %c0_9 = arith.constant 0 : index
    %12 = vector.load %arg4[%c0_8, %c0_9] : memref<32x32xf32, #tpu.memory_space<vmem>>, vector<32x32xf32>
    %cst_10 = arith.constant dense<0.000000e+00> : vector<32x32xf32>
    %13 = tpu.matmul %12, %10, %cst_10 {dimension_numbers = #tpu.dot_dimension_numbers<[1], [0], [0], [1], [0, 0, 1, 1], [], []>} : vector<32x32xf32>, vector<32x32xf32>, vector<32x32xf32> -> vector<32x32xf32>
    %c0_11 = arith.constant 0 : index
    %c0_12 = arith.constant 0 : index
    %14 = vector.load %arg5[%c0_11, %c0_12] : memref<32x1xf32, #tpu.memory_space<vmem>>, vector<32x1xf32>
    %15 = vector.broadcast %14 : vector<32x1xf32> to vector<32x32xf32>
    %16 = arith.addf %13, %15 : vector<32x32xf32>
    %cst_13 = arith.constant 0.000000e+00 : f32
    %17 = vector.broadcast %cst_13 : f32 to vector<32x32xf32>
    %18 = arith.maximumf %16, %17 : vector<32x32xf32>
    %c0_14 = arith.constant 0 : index
    %c0_15 = arith.constant 0 : index
    %19 = vector.load %arg6[%c0_14, %c0_15] : memref<1x32xf32, #tpu.memory_space<vmem>>, vector<1x32xf32>
    %cst_16 = arith.constant dense<0.000000e+00> : vector<1x32xf32>
    %20 = tpu.matmul %19, %18, %cst_16 {dimension_numbers = #tpu.dot_dimension_numbers<[1], [0], [0], [1], [0, 0, 1, 1], [], []>} : vector<1x32xf32>, vector<32x32xf32>, vector<1x32xf32> -> vector<1x32xf32>
    %c0_17 = arith.constant 0 : index
    %c0_18 = arith.constant 0 : index
    %21 = vector.load %arg7[%c0_17, %c0_18] : memref<1x1xf32, #tpu.memory_space<vmem>>, vector<1x1xf32>
    %22 = vector.broadcast %21 : vector<1x1xf32> to vector<1x32xf32>
    %23 = arith.addf %20, %22 : vector<1x32xf32>
    %c0_19 = arith.constant 0 : index
    %c0_20 = arith.constant 0 : index
    %24 = vector.load %arg14[%c0_19, %c0_20] : memref<32x128xf32, #tpu.memory_space<vmem>>, vector<32x128xf32>
    %cst_21 = arith.constant dense<0.000000e+00> : vector<1x128xf32>
    %25 = tpu.matmul %23, %24, %cst_21 {dimension_numbers = #tpu.dot_dimension_numbers<[1], [0], [0], [1], [0, 0, 1, 1], [], []>} : vector<1x32xf32>, vector<32x128xf32>, vector<1x128xf32> -> vector<1x128xf32>
    %c0_22 = arith.constant 0 : index
    %c0_23 = arith.constant 0 : index
    %26 = vector.load %arg16[%c0_22, %c0_23] : memref<1x1024xf32, #tpu.memory_space<vmem>>, vector<1x128xf32>
    tpu.vector_store %arg16[%c0_22, %c0_23], %25 {strides = array<i32>} : memref<1x1024xf32, #tpu.memory_space<vmem>>, vector<1x128xf32>,
    %c0_24 = arith.constant 0 : index
    %c0_25 = arith.constant 0 : index
    %27 = vector.load %arg9[%c0_24, %c0_25] : memref<32x32xf32, #tpu.memory_space<vmem>>, vector<32x32xf32>
    %cst_26 = arith.constant dense<0.000000e+00> : vector<1x32xf32>
    %28 = tpu.matmul %23, %27, %cst_26 {dimension_numbers = #tpu.dot_dimension_numbers<[1], [0], [0], [1], [0, 0, 1, 1], [], []>} : vector<1x32xf32>, vector<32x32xf32>, vector<1x32xf32> -> vector<1x32xf32>
    %29 = arith.addf %10, %11 : vector<32x32xf32>
    %c0_27 = arith.constant 0 : index
    %c0_28 = arith.constant 0 : index
    %30 = vector.load %arg8[%c0_27, %c0_28] : memref<32x1xf32, #tpu.memory_space<vmem>>, vector<32x1xf32>
    %31 = vector.broadcast %30 : vector<32x1xf32> to vector<32x32xf32>
    %32 = vector.broadcast %28 : vector<1x32xf32> to vector<32x32xf32>
    %33 = arith.mulf %31, %32 : vector<32x32xf32>
    %34 = arith.addf %29, %33 : vector<32x32xf32>
    %c0_29 = arith.constant 0 : index
    %c0_30 = arith.constant 0 : index
    %35 = vector.load %arg10[%c0_29, %c0_30] : memref<32x32xf32, #tpu.memory_space<vmem>>, vector<32x32xf32>
    %cst_31 = arith.constant dense<0.000000e+00> : vector<32x32xf32>
    %36 = tpu.matmul %35, %34, %cst_31 {dimension_numbers = #tpu.dot_dimension_numbers<[1], [0], [0], [1], [0, 0, 1, 1], [], []>} : vector<32x32xf32>, vector<32x32xf32>, vector<32x32xf32> -> vector<32x32xf32>
    %c0_32 = arith.constant 0 : index
    %c0_33 = arith.constant 0 : index
    %37 = vector.load %arg11[%c0_32, %c0_33] : memref<32x1xf32, #tpu.memory_space<vmem>>, vector<32x1xf32>
    %38 = vector.broadcast %37 : vector<32x1xf32> to vector<32x32xf32>
    %39 = arith.addf %36, %38 : vector<32x32xf32>
    %cst_34 = arith.constant 0.000000e+00 : f32
    %40 = vector.broadcast %cst_34 : f32 to vector<32x32xf32>
    %41 = arith.maximumf %39, %40 : vector<32x32xf32>
    %c0_35 = arith.constant 0 : index
    %c0_36 = arith.constant 0 : index
    %42 = vector.load %arg12[%c0_35, %c0_36] : memref<1x32xf32, #tpu.memory_space<vmem>>, vector<1x32xf32>
    %cst_37 = arith.constant dense<0.000000e+00> : vector<1x32xf32>
    %43 = tpu.matmul %42, %41, %cst_37 {dimension_numbers = #tpu.dot_dimension_numbers<[1], [0], [0], [1], [0, 0, 1, 1], [], []>} : vector<1x32xf32>, vector<32x32xf32>, vector<1x32xf32> -> vector<1x32xf32>
    %c0_38 = arith.constant 0 : index
    %c0_39 = arith.constant 0 : index
    %44 = vector.load %arg13[%c0_38, %c0_39] : memref<1x1xf32, #tpu.memory_space<vmem>>, vector<1x1xf32>
    %45 = vector.broadcast %44 : vector<1x1xf32> to vector<1x32xf32>
    %46 = arith.addf %43, %45 : vector<1x32xf32>
    %c0_40 = arith.constant 0 : index
    %c0_41 = arith.constant 0 : index
    %47 = vector.load %arg15[%c0_40, %c0_41] : memref<32x896xf32, #tpu.memory_space<vmem>>, vector<32x896xf32>
    %cst_42 = arith.constant dense<0.000000e+00> : vector<1x896xf32>
    %48 = tpu.matmul %46, %47, %cst_42 {dimension_numbers = #tpu.dot_dimension_numbers<[1], [0], [0], [1], [0, 0, 1, 1], [], []>} : vector<1x32xf32>, vector<32x896xf32>, vector<1x896xf32> -> vector<1x896xf32>
    %c0_43 = arith.constant 0 : index
    %c128 = arith.constant 128 : index
    %49 = vector.load %arg16[%c0_43, %c128] : memref<1x1024xf32, #tpu.memory_space<vmem>>, vector<1x896xf32>
    tpu.vector_store %arg16[%c0_43, %c128], %48 {strides = array<i32>} : memref<1x1024xf32, #tpu.memory_space<vmem>>, vector<1x896xf32>,
    return
  }
}

</mosaic_0001>

<llo_original>
// kernel: sub.4
$region0: #{sub.4}
  #allocation0 [shape = 's32[1]{0}', space=sflag, size = 0x4, scoped, tag = 'scoped memory for sub.4']
  %s0 = inlined_call_operand.vmem [shape: f32[32], index: 0, kind: input, shape index: {}]
  %s1 = inlined_call_operand.vmem [shape: f32[32], index: 1, kind: input, shape index: {}]
  %s2 = inlined_call_operand.vmem [shape: f32[32], index: 2, kind: output, shape index: {}]
  %v3 = vld [vmem:[%s0] sm:$0x1]
  %v4 = vld [vmem:[%s1] sm:$0x1]
  %5 = xla_tuple %v3, %v4
  %6 = xla_tuple %5
  %v7 = vsub.f32 %v3, %v4
  %8 = xla_tuple %v7
  %9 = vst [vmem:[%s2] sm:$0x1] %v7

// kernel: _sam_forward.1
$region0: #{_sam_forward.1}
  #allocation0 [shape = 'u32[]', space=smem, size = 0x4, offset = 0x4, fixed_abs, tag = 'smem constant byte address 0x4 - core index']
  #allocation1 [shape = 'u32[144,128]{1,0:T(1,128)}', space=vmem, size = 0x12000, scoped, tag = 'internal scratch']
  #allocation2 [shape = 'f32[1,1]{1,0:T(1,128)S(1)}', space=vmem, size = 0x200, scoped, tag = 'scoped memory for _sam_forward.1']
  #allocation3 [shape = 'f32[1,1]{1,0:T(1,128)S(1)}', space=vmem, size = 0x200, scoped, tag = 'scoped memory for _sam_forward.1']
  %s0 = inlined_call_operand.vmem [shape: f32[48,32], index: 0, kind: input, shape index: {}]
  %s1 = inlined_call_operand.vmem [shape: f32[64,48], index: 1, kind: input, shape index: {}]
  %s2 = inlined_call_operand.vmem [shape: f32[64,1], index: 2, kind: input, shape index: {}]
  %s3 = inlined_call_operand.vmem [shape: f32[32,32], index: 3, kind: input, shape index: {}]
  %s4 = inlined_call_operand.vmem [shape: f32[32,32], index: 4, kind: input, shape index: {}]
  %s5 = inlined_call_operand.vmem [shape: f32[32,1], index: 5, kind: input, shape index: {}]
  %s6 = inlined_call_operand.vmem [shape: f32[1,32], index: 6, kind: input, shape index: {}]
  %s7 = inlined_call_operand.<no memory space> [shape: f32[1,1], index: 7, kind: input, shape index: {}]
  %s8 = inlined_call_operand.vmem [shape: f32[32,1], index: 8, kind: input, shape index: {}]
  %s9 = inlined_call_operand.vmem [shape: f32[32,32], index: 9, kind: input, shape index: {}]
  %s10 = inlined_call_operand.vmem [shape: f32[32,32], index: 10, kind: input, shape index: {}]
  %s11 = inlined_call_operand.vmem [shape: f32[32,1], index: 11, kind: input, shape index: {}]
  %s12 = inlined_call_operand.vmem [shape: f32[1,32], index: 12, kind: input, shape index: {}]
  %s13 = inlined_call_operand.<no memory space> [shape: f32[1,1], index: 13, kind: input, shape index: {}]
  %s14 = inlined_call_operand.vmem [shape: f32[32,128], index: 14, kind: input, shape index: {}]
  %s15 = inlined_call_operand.vmem [shape: f32[32,896], index: 15, kind: input, shape index: {}]
  %s16 = inlined_call_operand.vmem [shape: f32[1,1024], index: 16, kind: output, shape index: {}]
  %s17 = sld [smem:[#allocation0]]
  $region74: #{_sam_forward.1} parent=0
    _
  %s19 = ssub.s32 1, %s17
  %s20 = scalar_select 0, %s19, %s17
  %v21 = vstv %s7
  %22 = vst [vmem:[#allocation2] sm:$0x1] %v21
  %v23 = vstv %s13
  %24 = vst [vmem:[#allocation3] sm:$0x1] %v23
  // Predicated region
  $region2: #{_sam_forward.1} parent=0 // pred_check
    _
  $region3: #{_sam_forward.1} parent=0 // pred_check_branch
    %26 = sbr.rel (0) target = $region5
  $region4: #{_sam_forward.1} parent=0 // pred_region
    _
  $region5: #{_sam_forward.1} parent=0 // pred_fallthru
    _
  // Predicated region
  $region6: #{_sam_forward.1} parent=0 // pred_check
    _
  $region7: #{_sam_forward.1} parent=0 // pred_check_branch
    %28 = sbr.rel (0) target = $region9
  $region8: #{_sam_forward.1} parent=0 // pred_region
    _
  $region9: #{_sam_forward.1} parent=0 // pred_fallthru
    _
  // Predicated region
  $region10: #{_sam_forward.1} parent=0 // pred_check
    _
  $region11: #{_sam_forward.1} parent=0 // pred_check_branch
    %30 = sbr.rel (0) target = $region13
  $region12: #{_sam_forward.1} parent=0 // pred_region
    _
  $region13: #{_sam_forward.1} parent=0 // pred_fallthru
    _
  // Predicated region
  $region14: #{_sam_forward.1} parent=0 // pred_check
    _
  $region15: #{_sam_forward.1} parent=0 // pred_check_branch
    %32 = sbr.rel (0) target = $region17
  $region16: #{_sam_forward.1} parent=0 // pred_region
    _
  $region17: #{_sam_forward.1} parent=0 // pred_fallthru
    _
  // Predicated region
  $region18: #{_sam_forward.1} parent=0 // pred_check
    _
  $region19: #{_sam_forward.1} parent=0 // pred_check_branch
    %34 = sbr.rel (0) target = $region21
  $region20: #{_sam_forward.1} parent=0 // pred_region
    _
  $region21: #{_sam_forward.1} parent=0 // pred_fallthru
    _
  // Predicated region
  $region22: #{_sam_forward.1} parent=0 // pred_check
    _
  $region23: #{_sam_forward.1} parent=0 // pred_check_branch
    %36 = sbr.rel (0) target = $region25
  $region24: #{_sam_forward.1} parent=0 // pred_region
    _
  $region25: #{_sam_forward.1} parent=0 // pred_fallthru
    _
  // Predicated region
  $region26: #{_sam_forward.1} parent=0 // pred_check
    _
  $region27: #{_sam_forward.1} parent=0 // pred_check_branch
    %38 = sbr.rel (0) target = $region29
  $region28: #{_sam_forward.1} parent=0 // pred_region
    _
  $region29: #{_sam_forward.1} parent=0 // pred_fallthru
    _
  // Predicated region
  $region30: #{_sam_forward.1} parent=0 // pred_check
    _
  $region31: #{_sam_forward.1} parent=0 // pred_check_branch
    %40 = sbr.rel (0) target = $region33
  $region32: #{_sam_forward.1} parent=0 // pred_region
    _
  $region33: #{_sam_forward.1} parent=0 // pred_fallthru
    _
  // Predicated region
  $region34: #{_sam_forward.1} parent=0 // pred_check
    _
  $region35: #{_sam_forward.1} parent=0 // pred_check_branch
    %42 = sbr.rel (0) target = $region37
  $region36: #{_sam_forward.1} parent=0 // pred_region
    _
  $region37: #{_sam_forward.1} parent=0 // pred_fallthru
    _
  // Predicated region
  $region38: #{_sam_forward.1} parent=0 // pred_check
    _
  $region39: #{_sam_forward.1} parent=0 // pred_check_branch
    %44 = sbr.rel (0) target = $region41
  $region40: #{_sam_forward.1} parent=0 // pred_region
    _
  $region41: #{_sam_forward.1} parent=0 // pred_fallthru
    _
  // Predicated region
  $region42: #{_sam_forward.1} parent=0 // pred_check
    _
  $region43: #{_sam_forward.1} parent=0 // pred_check_branch
    %46 = sbr.rel (0) target = $region45
  $region44: #{_sam_forward.1} parent=0 // pred_region
    _
  $region45: #{_sam_forward.1} parent=0 // pred_fallthru
    _
  // Predicated region
  $region46: #{_sam_forward.1} parent=0 // pred_check
    _
  $region47: #{_sam_forward.1} parent=0 // pred_check_branch
    %48 = sbr.rel (0) target = $region49
  $region48: #{_sam_forward.1} parent=0 // pred_region
    _
  $region49: #{_sam_forward.1} parent=0 // pred_fallthru
    _
  // Predicated region
  $region50: #{_sam_forward.1} parent=0 // pred_check
    _
  $region51: #{_sam_forward.1} parent=0 // pred_check_branch
    %50 = sbr.rel (0) target = $region53
  $region52: #{_sam_forward.1} parent=0 // pred_region
    _
  $region53: #{_sam_forward.1} parent=0 // pred_fallthru
    _
  // Predicated region
  $region54: #{_sam_forward.1} parent=0 // pred_check
    _
  $region55: #{_sam_forward.1} parent=0 // pred_check_branch
    %52 = sbr.rel (0) target = $region57
  $region56: #{_sam_forward.1} parent=0 // pred_region
    _
  $region57: #{_sam_forward.1} parent=0 // pred_fallthru
    _
  // Predicated region
  $region58: #{_sam_forward.1} parent=0 // pred_check
    _
  $region59: #{_sam_forward.1} parent=0 // pred_check_branch
    %54 = sbr.rel (0) target = $region61
  $region60: #{_sam_forward.1} parent=0 // pred_region
    _
  $region61: #{_sam_forward.1} parent=0 // pred_fallthru
    _
  // Predicated region
  $region62: #{_sam_forward.1} parent=0 // pred_check
    _
  $region63: #{_sam_forward.1} parent=0 // pred_check_branch
    %56 = sbr.rel (0) target = $region65
  $region64: #{_sam_forward.1} parent=0 // pred_region
    _
  $region65: #{_sam_forward.1} parent=0 // pred_fallthru
    _
  %v57 = vld [vmem:[%s1] sm:$0xff]
  %v58 = vld [vmem:[%s1 + $0x8] sm:$0xff]
  %v59 = vld [vmem:[%s1 + $0x10] sm:$0xff]
  %v60 = vld [vmem:[%s1 + $0x18] sm:$0xff]
  %v61 = vld [vmem:[%s1 + $0x20] sm:$0xff]
  %v62 = vld [vmem:[%s1 + $0x28] sm:$0xff]
  %v63 = vld [vmem:[%s1 + $0x30] sm:$0xff]
  %v64 = vld [vmem:[%s1 + $0x38] sm:$0xff]
  %v65 = vld [vmem:[%s0] sm:$0xff]
  %v66 = vld [vmem:[%s0 + $0x8] sm:$0xff]
  %v67 = vld [vmem:[%s0 + $0x10] sm:$0xff]
  %v68 = vld [vmem:[%s0 + $0x18] sm:$0xff]
  %v69 = vld [vmem:[%s0 + $0x20] sm:$0xff]
  %v70 = vld [vmem:[%s0 + $0x28] sm:$0xff]
  %v71 = vld [vmem:[%s2] sm:$0xff]
  %v72 = vld [vmem:[%s2 + $0x8] sm:$0xff]
  %v73 = vld [vmem:[%s2 + $0x10] sm:$0xff]
  %v74 = vld [vmem:[%s2 + $0x18] sm:$0xff]
  %v75 = vld [vmem:[%s2 + $0x20] sm:$0xff]
  %v76 = vld [vmem:[%s2 + $0x28] sm:$0xff]
  %v77 = vld [vmem:[%s2 + $0x30] sm:$0xff]
  %v78 = vld [vmem:[%s2 + $0x38] sm:$0xff]
  %80 = vset.pattern.permute.xlu0 0
  %81 = vperm.xlu0 %80, %v71
  %v82 = vpop.permute.xlu0 %81
  %85 = vset.pattern.permute.xlu0 0
  %86 = vperm.xlu0 %85, %v72
  %v87 = vpop.permute.xlu0 %86
  %90 = vset.pattern.permute.xlu0 0
  %91 = vperm.xlu0 %90, %v73
  %v92 = vpop.permute.xlu0 %91
  %95 = vset.pattern.permute.xlu0 0
  %96 = vperm.xlu0 %95, %v74
  %v97 = vpop.permute.xlu0 %96
  %100 = vset.pattern.permute.xlu0 0
  %101 = vperm.xlu0 %100, %v75
  %v102 = vpop.permute.xlu0 %101
  %105 = vset.pattern.permute.xlu0 0
  %106 = vperm.xlu0 %105, %v76
  %v107 = vpop.permute.xlu0 %106
  %110 = vset.pattern.permute.xlu0 0
  %111 = vperm.xlu0 %110, %v77
  %v112 = vpop.permute.xlu0 %111
  %115 = vset.pattern.permute.xlu0 0
  %116 = vperm.xlu0 %115, %v78
  %v117 = vpop.permute.xlu0 %116
  %vm119 = vcmask 392192
  %v121 = vsel %vm119, %v57, 0
  %v124 = vsel %vm119, %v58, 0
  %v127 = vsel %vm119, %v59, 0
  %v130 = vsel %vm119, %v60, 0
  %v133 = vsel %vm119, %v61, 0
  %v136 = vsel %vm119, %v62, 0
  %v139 = vsel %vm119, %v63, 0
  %v142 = vsel %vm119, %v64, 0
  %144 = vmatprep.subr.mxu0 0.0
  %145 = vmatpush1.msra.mxu0 %v65
  %146 = vmatprep.subr.mxu0 0.0
  %147 = vmatpush1.msra.mxu0 %v66
  %148 = vmatprep.subr.mxu0 0.0
  %149 = vmatpush1.msra.mxu0 %v67
  %150 = vmatprep.subr.mxu0 0.0
  %151 = vmatpush1.msra.mxu0 %v68
  %152 = vmatprep.subr.mxu0 0.0
  %153 = vmatpush1.msra.mxu0 %v69
  %154 = vmatprep.subr.mxu0 0.0
  %155 = vmatpush1.msra.mxu0 %v70
  %156 = vmatprep.subr.mxu0 0.0
  %157 = vmatpush1.msra.mxu0 0.0
  %158 = vmatprep.subr.mxu0 0.0
  %159 = vmatpush1.msra.mxu0 0.0
  %160 = vmatprep.subr.mxu0 0.0
  %161 = vmatpush1.msra.mxu0 0.0
  %162 = vmatprep.subr.mxu0 0.0
  %163 = vmatpush1.msra.mxu0 0.0
  %164 = vmatprep.subr.mxu0 0.0
  %165 = vmatpush1.msra.mxu0 0.0
  %166 = vmatprep.subr.mxu0 0.0
  %167 = vmatpush1.msra.mxu0 0.0
  %168 = vmatprep.subr.mxu0 0.0
  %169 = vmatpush1.msra.mxu0 0.0
  %170 = vmatprep.subr.mxu0 0.0
  %171 = vmatpush1.msra.mxu0 0.0
  %172 = vmatprep.subr.mxu0 0.0
  %173 = vmatpush1.msra.mxu0 0.0
  %174 = vmatprep.subr.mxu0 0.0
  %175 = vmatpush1.msra.mxu0 0.0
  %176 = vmatprep.subr.mxu0 0.0
  %177 = vmatpush1.msra.mxu0 0.0
  %178 = vmatprep.subr.mxu0 0.0
  %179 = vmatpush1.msra.mxu0 0.0
  %180 = vmatprep.subr.mxu0 0.0
  %181 = vmatpush1.msra.mxu0 0.0
  %182 = vmatprep.subr.mxu0 0.0
  %183 = vmatpush1.msra.mxu0 0.0
  %184 = vmatprep.subr.mxu0 0.0
  %185 = vmatpush1.msra.mxu0 0.0
  %186 = vmatprep.subr.mxu0 0.0
  %187 = vmatpush1.msra.mxu0 0.0
  %188 = vmatprep.subr.mxu0 0.0
  %189 = vmatpush1.msra.mxu0 0.0
  %190 = vmatprep.subr.mxu0 0.0
  %191 = vmatpush1.msra.mxu0 0.0
  %192 = vmatprep.subr.mxu0 0.0
  %193 = vmatpush1.msra.mxu0 0.0
  %194 = vmatprep.subr.mxu0 0.0
  %195 = vmatpush1.msra.mxu0 0.0
  %196 = vmatprep.subr.mxu0 0.0
  %197 = vmatpush1.msra.mxu0 0.0
  %198 = vmatprep.subr.mxu0 0.0
  %199 = vmatpush1.msra.mxu0 0.0
  %200 = vmatprep.subr.mxu0 0.0
  %201 = vmatpush1.msra.mxu0 0.0
  %202 = vmatprep.subr.mxu0 0.0
  %203 = vmatpush1.msra.mxu0 0.0
  %204 = vmatprep.subr.mxu0 0.0
  %205 = vmatpush1.msra.mxu0 0.0
  %206 = vmatprep.subr.mxu0 0.0
  %207 = vmatpush1.msra.mxu0 0.0
  %208 = vmatprep.mubr.f32.mxu0 0.0
  %209 = vmatmul.mubr.f32.gmra.mrb[0].mxu0 %v121
  %v210 = vpop.f32.mrb[0].mxu0
  %v211 = vadd.f32 %v82, %v210
  %v212 = vpop.f32.mrb[0].mxu0
  %213 = vmatprep.mubr.f32.mxu0 0.0
  %214 = vmatmul.mubr.f32.gmra.mrb[0].mxu0 %v124
  %v215 = vpop.f32.mrb[0].mxu0
  %v216 = vadd.f32 %v87, %v215
  %v217 = vpop.f32.mrb[0].mxu0
  %218 = vmatprep.mubr.f32.mxu0 0.0
  %219 = vmatmul.mubr.f32.gmra.mrb[0].mxu0 %v127
  %v220 = vpop.f32.mrb[0].mxu0
  %v221 = vadd.f32 %v92, %v220
  %v222 = vpop.f32.mrb[0].mxu0
  %223 = vmatprep.mubr.f32.mxu0 0.0
  %224 = vmatmul.mubr.f32.gmra.mrb[0].mxu0 %v130
  %v225 = vpop.f32.mrb[0].mxu0
  %v226 = vadd.f32 %v97, %v225
  %v227 = vpop.f32.mrb[0].mxu0
  %228 = vmatprep.mubr.f32.mxu0 0.0
  %229 = vmatmul.mubr.f32.gmra.mrb[0].mxu0 %v133
  %v230 = vpop.f32.mrb[0].mxu0
  %v231 = vadd.f32 %v102, %v230
  %v232 = vpop.f32.mrb[0].mxu0
  %233 = vmatprep.mubr.f32.mxu0 0.0
  %234 = vmatmul.mubr.f32.gmra.mrb[0].mxu0 %v136
  %v235 = vpop.f32.mrb[0].mxu0
  %v236 = vadd.f32 %v107, %v235
  %v237 = vpop.f32.mrb[0].mxu0
  %238 = vmatprep.mubr.f32.mxu0 0.0
  %239 = vmatmul.mubr.f32.gmra.mrb[0].mxu0 %v139
  %v240 = vpop.f32.mrb[0].mxu0
  %v241 = vadd.f32 %v112, %v240
  %v242 = vpop.f32.mrb[0].mxu0
  %243 = vmatprep.mubr.f32.mxu0 0.0
  %244 = vmatmul.mubr.f32.gmra.mrb[0].mxu0 %v142
  %v245 = vpop.f32.mrb[0].mxu0
  %v246 = vadd.f32 %v117, %v245
  %v247 = vpop.f32.mrb[0].mxu0
  %248 = vdwg.mxu0
  %v249 = vmax.f32 %v211, 0.0
  %v250 = vmax.f32 %v216, 0.0
  %v251 = vmax.f32 %v221, 0.0
  %v252 = vmax.f32 %v226, 0.0
  %v253 = vmax.f32 %v231, 0.0
  %v254 = vmax.f32 %v236, 0.0
  %v255 = vmax.f32 %v241, 0.0
  %v256 = vmax.f32 %v246, 0.0
  %v257 = vld [vmem:[%s3] sm:$0xff]
  %v258 = vld [vmem:[%s3 + $0x8] sm:$0xff]
  %v259 = vld [vmem:[%s3 + $0x10] sm:$0xff]
  %v260 = vld [vmem:[%s3 + $0x18] sm:$0xff]
  %v261 = vadd.f32 %v249, %v257
  %v262 = vadd.f32 %v250, %v258
  %v263 = vadd.f32 %v251, %v259
  %v264 = vadd.f32 %v252, %v260
  %v265 = vld [vmem:[%s4] sm:$0xff]
  %v266 = vld [vmem:[%s4 + $0x8] sm:$0xff]
  %v267 = vld [vmem:[%s4 + $0x10] sm:$0xff]
  %v268 = vld [vmem:[%s4 + $0x18] sm:$0xff]
  %v269 = vld [vmem:[%s5] sm:$0xff]
  %v270 = vld [vmem:[%s5 + $0x8] sm:$0xff]
  %v271 = vld [vmem:[%s5 + $0x10] sm:$0xff]
  %v272 = vld [vmem:[%s5 + $0x18] sm:$0xff]
  %274 = vset.pattern.permute.xlu0 0
  %275 = vperm.xlu0 %274, %v269
  %v276 = vpop.permute.xlu0 %275
  %279 = vset.pattern.permute.xlu0 0
  %280 = vperm.xlu0 %279, %v270
  %v281 = vpop.permute.xlu0 %280
  %284 = vset.pattern.permute.xlu0 0
  %285 = vperm.xlu0 %284, %v271
  %v286 = vpop.permute.xlu0 %285
  %289 = vset.pattern.permute.xlu0 0
  %290 = vperm.xlu0 %289, %v272
  %v291 = vpop.permute.xlu0 %290
  %vm293 = vcmask 261120
  %v295 = vsel %vm293, %v265, 0
  %v298 = vsel %vm293, %v266, 0
  %v301 = vsel %vm293, %v267, 0
  %v304 = vsel %vm293, %v268, 0
  %306 = vmatprep.subr.mxu0 0.0
  %307 = vmatpush1.msra.mxu0 %v261
  %308 = vmatprep.subr.mxu0 0.0
  %309 = vmatpush1.msra.mxu0 %v262
  %310 = vmatprep.subr.mxu0 0.0
  %311 = vmatpush1.msra.mxu0 %v263
  %312 = vmatprep.subr.mxu0 0.0
  %313 = vmatpush1.msra.mxu0 %v264
  %314 = vmatprep.subr.mxu0 0.0
  %315 = vmatpush1.msra.mxu0 0.0
  %316 = vmatprep.subr.mxu0 0.0
  %317 = vmatpush1.msra.mxu0 0.0
  %318 = vmatprep.subr.mxu0 0.0
  %319 = vmatpush1.msra.mxu0 0.0
  %320 = vmatprep.subr.mxu0 0.0
  %321 = vmatpush1.msra.mxu0 0.0
  %322 = vmatprep.subr.mxu0 0.0
  %323 = vmatpush1.msra.mxu0 0.0
  %324 = vmatprep.subr.mxu0 0.0
  %325 = vmatpush1.msra.mxu0 0.0
  %326 = vmatprep.subr.mxu0 0.0
  %327 = vmatpush1.msra.mxu0 0.0
  %328 = vmatprep.subr.mxu0 0.0
  %329 = vmatpush1.msra.mxu0 0.0
  %330 = vmatprep.subr.mxu0 0.0
  %331 = vmatpush1.msra.mxu0 0.0
  %332 = vmatprep.subr.mxu0 0.0
  %333 = vmatpush1.msra.mxu0 0.0
  %334 = vmatprep.subr.mxu0 0.0
  %335 = vmatpush1.msra.mxu0 0.0
  %336 = vmatprep.subr.mxu0 0.0
  %337 = vmatpush1.msra.mxu0 0.0
  %338 = vmatprep.subr.mxu0 0.0
  %339 = vmatpush1.msra.mxu0 0.0
  %340 = vmatprep.subr.mxu0 0.0
  %341 = vmatpush1.msra.mxu0 0.0
  %342 = vmatprep.subr.mxu0 0.0
  %343 = vmatpush1.msra.mxu0 0.0
  %344 = vmatprep.subr.mxu0 0.0
  %345 = vmatpush1.msra.mxu0 0.0
  %346 = vmatprep.subr.mxu0 0.0
  %347 = vmatpush1.msra.mxu0 0.0
  %348 = vmatprep.subr.mxu0 0.0
  %349 = vmatpush1.msra.mxu0 0.0
  %350 = vmatprep.subr.mxu0 0.0
  %351 = vmatpush1.msra.mxu0 0.0
  %352 = vmatprep.subr.mxu0 0.0
  %353 = vmatpush1.msra.mxu0 0.0
  %354 = vmatprep.subr.mxu0 0.0
  %355 = vmatpush1.msra.mxu0 0.0
  %356 = vmatprep.subr.mxu0 0.0
  %357 = vmatpush1.msra.mxu0 0.0
  %358 = vmatprep.subr.mxu0 0.0
  %359 = vmatpush1.msra.mxu0 0.0
  %360 = vmatprep.subr.mxu0 0.0
  %361 = vmatpush1.msra.mxu0 0.0
  %362 = vmatprep.subr.mxu0 0.0
  %363 = vmatpush1.msra.mxu0 0.0
  %364 = vmatprep.subr.mxu0 0.0
  %365 = vmatpush1.msra.mxu0 0.0
  %366 = vmatprep.subr.mxu0 0.0
  %367 = vmatpush1.msra.mxu0 0.0
  %368 = vmatprep.subr.mxu0 0.0
  %369 = vmatpush1.msra.mxu0 0.0
  %370 = vmatprep.mubr.f32.mxu0 0.0
  %371 = vmatmul.mubr.f32.gmra.mrb[0].mxu0 %v295
  %v372 = vpop.f32.mrb[0].mxu0
  %v373 = vadd.f32 %v276, %v372
  %v374 = vpop.f32.mrb[0].mxu0
  %375 = vmatprep.mubr.f32.mxu0 0.0
  %376 = vmatmul.mubr.f32.gmra.mrb[0].mxu0 %v298
  %v377 = vpop.f32.mrb[0].mxu0
  %v378 = vadd.f32 %v281, %v377
  %v379 = vpop.f32.mrb[0].mxu0
  %380 = vmatprep.mubr.f32.mxu0 0.0
  %381 = vmatmul.mubr.f32.gmra.mrb[0].mxu0 %v301
  %v382 = vpop.f32.mrb[0].mxu0
  %v383 = vadd.f32 %v286, %v382
  %v384 = vpop.f32.mrb[0].mxu0
  %385 = vmatprep.mubr.f32.mxu0 0.0
  %386 = vmatmul.mubr.f32.gmra.mrb[0].mxu0 %v304
  %v387 = vpop.f32.mrb[0].mxu0
  %v388 = vadd.f32 %v291, %v387
  %v389 = vpop.f32.mrb[0].mxu0
  %390 = vdwg.mxu0
  %v391 = vmax.f32 %v373, 0.0
  %v392 = vmax.f32 %v378, 0.0
  %v393 = vmax.f32 %v383, 0.0
  %v394 = vmax.f32 %v388, 0.0
  %v395 = vld [vmem:[%s6] sm:$0x1]
  %v396 = vld [vmem:[#allocation2] sm:$0x1]
  %398 = vset.pattern.permute.xlu0 0
  %399 = vperm.xlu0 %398, %v396
  %v400 = vpop.permute.xlu0 %399
  %v402 = vlaneseq
  %v403 = vshrl.u32 %v402, 7
  %v404 = vsub.s32 0, %v403
  %v405 = vrot.slane %v400, %v404
  %v407 = vsel %vm293, %v395, 0
  %409 = vmatprep.subr.mxu0 0.0
  %410 = vmatpush1.msra.mxu0 %v391
  %411 = vmatprep.subr.mxu0 0.0
  %412 = vmatpush1.msra.mxu0 %v392
  %413 = vmatprep.subr.mxu0 0.0
  %414 = vmatpush1.msra.mxu0 %v393
  %415 = vmatprep.subr.mxu0 0.0
  %416 = vmatpush1.msra.mxu0 %v394
  %417 = vmatprep.subr.mxu0 0.0
  %418 = vmatpush1.msra.mxu0 0.0
  %419 = vmatprep.subr.mxu0 0.0
  %420 = vmatpush1.msra.mxu0 0.0
  %421 = vmatprep.subr.mxu0 0.0
  %422 = vmatpush1.msra.mxu0 0.0
  %423 = vmatprep.subr.mxu0 0.0
  %424 = vmatpush1.msra.mxu0 0.0
  %425 = vmatprep.subr.mxu0 0.0
  %426 = vmatpush1.msra.mxu0 0.0
  %427 = vmatprep.subr.mxu0 0.0
  %428 = vmatpush1.msra.mxu0 0.0
  %429 = vmatprep.subr.mxu0 0.0
  %430 = vmatpush1.msra.mxu0 0.0
  %431 = vmatprep.subr.mxu0 0.0
  %432 = vmatpush1.msra.mxu0 0.0
  %433 = vmatprep.subr.mxu0 0.0
  %434 = vmatpush1.msra.mxu0 0.0
  %435 = vmatprep.subr.mxu0 0.0
  %436 = vmatpush1.msra.mxu0 0.0
  %437 = vmatprep.subr.mxu0 0.0
  %438 = vmatpush1.msra.mxu0 0.0
  %439 = vmatprep.subr.mxu0 0.0
  %440 = vmatpush1.msra.mxu0 0.0
  %441 = vmatprep.subr.mxu0 0.0
  %442 = vmatpush1.msra.mxu0 0.0
  %443 = vmatprep.subr.mxu0 0.0
  %444 = vmatpush1.msra.mxu0 0.0
  %445 = vmatprep.subr.mxu0 0.0
  %446 = vmatpush1.msra.mxu0 0.0
  %447 = vmatprep.subr.mxu0 0.0
  %448 = vmatpush1.msra.mxu0 0.0
  %449 = vmatprep.subr.mxu0 0.0
  %450 = vmatpush1.msra.mxu0 0.0
  %451 = vmatprep.subr.mxu0 0.0
  %452 = vmatpush1.msra.mxu0 0.0
  %453 = vmatprep.subr.mxu0 0.0
  %454 = vmatpush1.msra.mxu0 0.0
  %455 = vmatprep.subr.mxu0 0.0
  %456 = vmatpush1.msra.mxu0 0.0
  %457 = vmatprep.subr.mxu0 0.0
  %458 = vmatpush1.msra.mxu0 0.0
  %459 = vmatprep.subr.mxu0 0.0
  %460 = vmatpush1.msra.mxu0 0.0
  %461 = vmatprep.subr.mxu0 0.0
  %462 = vmatpush1.msra.mxu0 0.0
  %463 = vmatprep.subr.mxu0 0.0
  %464 = vmatpush1.msra.mxu0 0.0
  %465 = vmatprep.subr.mxu0 0.0
  %466 = vmatpush1.msra.mxu0 0.0
  %467 = vmatprep.subr.mxu0 0.0
  %468 = vmatpush1.msra.mxu0 0.0
  %469 = vmatprep.subr.mxu0 0.0
  %470 = vmatpush1.msra.mxu0 0.0
  %471 = vmatprep.subr.mxu0 0.0
  %472 = vmatpush1.msra.mxu0 0.0
  %473 = vmatprep.mubr.f32.mxu0 0.0
  %474 = vmatmul.mubr.f32.gmra.mrb[0].mxu0 %v407
  %v475 = vpop.f32.mrb[0].mxu0
  %v476 = vadd.f32 %v405, %v475
  %v477 = vpop.f32.mrb[0].mxu0
  %478 = vdwg.mxu0
  %v479 = vld [vmem:[%s14] sm:$0xff]
  %v480 = vld [vmem:[%s14 + $0x8] sm:$0xff]
  %v481 = vld [vmem:[%s14 + $0x10] sm:$0xff]
  %v482 = vld [vmem:[%s14 + $0x18] sm:$0xff]
  %v484 = vsel %vm293, %v476, 0
  %486 = vmatprep.subr.mxu0 0.0
  %487 = vmatpush1.msra.mxu0 %v479
  %488 = vmatprep.subr.mxu0 0.0
  %489 = vmatpush1.msra.mxu0 %v480
  %490 = vmatprep.subr.mxu0 0.0
  %491 = vmatpush1.msra.mxu0 %v481
  %492 = vmatprep.subr.mxu0 0.0
  %493 = vmatpush1.msra.mxu0 %v482
  %494 = vmatprep.subr.mxu0 0.0
  %495 = vmatpush1.msra.mxu0 0.0
  %496 = vmatprep.subr.mxu0 0.0
  %497 = vmatpush1.msra.mxu0 0.0
  %498 = vmatprep.subr.mxu0 0.0
  %499 = vmatpush1.msra.mxu0 0.0
  %500 = vmatprep.subr.mxu0 0.0
  %501 = vmatpush1.msra.mxu0 0.0
  %502 = vmatprep.subr.mxu0 0.0
  %503 = vmatpush1.msra.mxu0 0.0
  %504 = vmatprep.subr.mxu0 0.0
  %505 = vmatpush1.msra.mxu0 0.0
  %506 = vmatprep.subr.mxu0 0.0
  %507 = vmatpush1.msra.mxu0 0.0
  %508 = vmatprep.subr.mxu0 0.0
  %509 = vmatpush1.msra.mxu0 0.0
  %510 = vmatprep.subr.mxu0 0.0
  %511 = vmatpush1.msra.mxu0 0.0
  %512 = vmatprep.subr.mxu0 0.0
  %513 = vmatpush1.msra.mxu0 0.0
  %514 = vmatprep.subr.mxu0 0.0
  %515 = vmatpush1.msra.mxu0 0.0
  %516 = vmatprep.subr.mxu0 0.0
  %517 = vmatpush1.msra.mxu0 0.0
  %518 = vmatprep.subr.mxu0 0.0
  %519 = vmatpush1.msra.mxu0 0.0
  %520 = vmatprep.subr.mxu0 0.0
  %521 = vmatpush1.msra.mxu0 0.0
  %522 = vmatprep.subr.mxu0 0.0
  %523 = vmatpush1.msra.mxu0 0.0
  %524 = vmatprep.subr.mxu0 0.0
  %525 = vmatpush1.msra.mxu0 0.0
  %526 = vmatprep.subr.mxu0 0.0
  %527 = vmatpush1.msra.mxu0 0.0
  %528 = vmatprep.subr.mxu0 0.0
  %529 = vmatpush1.msra.mxu0 0.0
  %530 = vmatprep.subr.mxu0 0.0
  %531 = vmatpush1.msra.mxu0 0.0
  %532 = vmatprep.subr.mxu0 0.0
  %533 = vmatpush1.msra.mxu0 0.0
  %534 = vmatprep.subr.mxu0 0.0
  %535 = vmatpush1.msra.mxu0 0.0
  %536 = vmatprep.subr.mxu0 0.0
  %537 = vmatpush1.msra.mxu0 0.0
  %538 = vmatprep.subr.mxu0 0.0
  %539 = vmatpush1.msra.mxu0 0.0
  %540 = vmatprep.subr.mxu0 0.0
  %541 = vmatpush1.msra.mxu0 0.0
  %542 = vmatprep.subr.mxu0 0.0
  %543 = vmatpush1.msra.mxu0 0.0
  %544 = vmatprep.subr.mxu0 0.0
  %545 = vmatpush1.msra.mxu0 0.0
  %546 = vmatprep.subr.mxu0 0.0
  %547 = vmatpush1.msra.mxu0 0.0
  %548 = vmatprep.subr.mxu0 0.0
  %549 = vmatpush1.msra.mxu0 0.0
  %550 = vmatprep.mubr.f32.mxu0 0.0
  %551 = vmatmul.mubr.f32.gmra.mrb[0].mxu0 %v484
  %v552 = vpop.f32.mrb[0].mxu0
  %v553 = vadd.f32 0.0, %v552
  %v554 = vpop.f32.mrb[0].mxu0
  %555 = vdwg.mxu0
  %v556 = vlaneseq
  %vm557 = vcmp.ge.s32.totalorder %v556, 0
  %vm558 = vcmp.lt.s32.totalorder %v556, 128
  %vm559 = vmand %vm557, %vm558
  %560 = vst.msk [vmem:[%s16] sm:$0x1] %vm559, %v553
  %v561 = vld [vmem:[%s9] sm:$0xff]
  %v562 = vld [vmem:[%s9 + $0x8] sm:$0xff]
  %v563 = vld [vmem:[%s9 + $0x10] sm:$0xff]
  %v564 = vld [vmem:[%s9 + $0x18] sm:$0xff]
  %565 = vmatprep.subr.mxu0 0.0
  %566 = vmatpush1.msra.mxu0 %v561
  %567 = vmatprep.subr.mxu0 0.0
  %568 = vmatpush1.msra.mxu0 %v562
  %569 = vmatprep.subr.mxu0 0.0
  %570 = vmatpush1.msra.mxu0 %v563
  %571 = vmatprep.subr.mxu0 0.0
  %572 = vmatpush1.msra.mxu0 %v564
  %573 = vmatprep.subr.mxu0 0.0
  %574 = vmatpush1.msra.mxu0 0.0
  %575 = vmatprep.subr.mxu0 0.0
  %576 = vmatpush1.msra.mxu0 0.0
  %577 = vmatprep.subr.mxu0 0.0
  %578 = vmatpush1.msra.mxu0 0.0
  %579 = vmatprep.subr.mxu0 0.0
  %580 = vmatpush1.msra.mxu0 0.0
  %581 = vmatprep.subr.mxu0 0.0
  %582 = vmatpush1.msra.mxu0 0.0
  %583 = vmatprep.subr.mxu0 0.0
  %584 = vmatpush1.msra.mxu0 0.0
  %585 = vmatprep.subr.mxu0 0.0
  %586 = vmatpush1.msra.mxu0 0.0
  %587 = vmatprep.subr.mxu0 0.0
  %588 = vmatpush1.msra.mxu0 0.0
  %589 = vmatprep.subr.mxu0 0.0
  %590 = vmatpush1.msra.mxu0 0.0
  %591 = vmatprep.subr.mxu0 0.0
  %592 = vmatpush1.msra.mxu0 0.0
  %593 = vmatprep.subr.mxu0 0.0
  %594 = vmatpush1.msra.mxu0 0.0
  %595 = vmatprep.subr.mxu0 0.0
  %596 = vmatpush1.msra.mxu0 0.0
  %597 = vmatprep.subr.mxu0 0.0
  %598 = vmatpush1.msra.mxu0 0.0
  %599 = vmatprep.subr.mxu0 0.0
  %600 = vmatpush1.msra.mxu0 0.0
  %601 = vmatprep.subr.mxu0 0.0
  %602 = vmatpush1.msra.mxu0 0.0
  %603 = vmatprep.subr.mxu0 0.0
  %604 = vmatpush1.msra.mxu0 0.0
  %605 = vmatprep.subr.mxu0 0.0
  %606 = vmatpush1.msra.mxu0 0.0
  %607 = vmatprep.subr.mxu0 0.0
  %608 = vmatpush1.msra.mxu0 0.0
  %609 = vmatprep.subr.mxu0 0.0
  %610 = vmatpush1.msra.mxu0 0.0
  %611 = vmatprep.subr.mxu0 0.0
  %612 = vmatpush1.msra.mxu0 0.0
  %613 = vmatprep.subr.mxu0 0.0
  %614 = vmatpush1.msra.mxu0 0.0
  %615 = vmatprep.subr.mxu0 0.0
  %616 = vmatpush1.msra.mxu0 0.0
  %617 = vmatprep.subr.mxu0 0.0
  %618 = vmatpush1.msra.mxu0 0.0
  %619 = vmatprep.subr.mxu0 0.0
  %620 = vmatpush1.msra.mxu0 0.0
  %621 = vmatprep.subr.mxu0 0.0
  %622 = vmatpush1.msra.mxu0 0.0
  %623 = vmatprep.subr.mxu0 0.0
  %624 = vmatpush1.msra.mxu0 0.0
  %625 = vmatprep.subr.mxu0 0.0
  %626 = vmatpush1.msra.mxu0 0.0
  %627 = vmatprep.subr.mxu0 0.0
  %628 = vmatpush1.msra.mxu0 0.0
  %629 = vmatprep.mubr.f32.mxu0 0.0
  %630 = vmatmul.mubr.f32.gmra.mrb[0].mxu0 %v484
  %v631 = vpop.f32.mrb[0].mxu0
  %v632 = vadd.f32 0.0, %v631
  %v633 = vpop.f32.mrb[0].mxu0
  %634 = vdwg.mxu0
  %v635 = vadd.f32 %v261, %v253
  %v636 = vadd.f32 %v262, %v254
  %v637 = vadd.f32 %v263, %v255
  %v638 = vadd.f32 %v264, %v256
  %v639 = vld [vmem:[%s8] sm:$0xff]
  %v640 = vld [vmem:[%s8 + $0x8] sm:$0xff]
  %v641 = vld [vmem:[%s8 + $0x10] sm:$0xff]
  %v642 = vld [vmem:[%s8 + $0x18] sm:$0xff]
  %644 = vset.pattern.permute.xlu0 0
  %645 = vperm.xlu0 %644, %v639
  %v646 = vpop.permute.xlu0 %645
  %649 = vset.pattern.permute.xlu0 0
  %650 = vperm.xlu0 %649, %v640
  %v651 = vpop.permute.xlu0 %650
  %654 = vset.pattern.permute.xlu0 0
  %655 = vperm.xlu0 %654, %v641
  %v656 = vpop.permute.xlu0 %655
  %659 = vset.pattern.permute.xlu0 0
  %660 = vperm.xlu0 %659, %v642
  %v661 = vpop.permute.xlu0 %660
  %v663 = vlaneseq
  %v664 = vshrl.u32 %v663, 7
  %v665 = vsub.s32 0, %v664
  %v666 = vrot.slane %v632, %v665
  %v667 = vmul.f32 %v646, %v666
  %v668 = vmul.f32 %v651, %v666
  %v669 = vmul.f32 %v656, %v666
  %v670 = vmul.f32 %v661, %v666
  %v671 = vadd.f32 %v635, %v667
  %v672 = vadd.f32 %v636, %v668
  %v673 = vadd.f32 %v637, %v669
  %v674 = vadd.f32 %v638, %v670
  %v675 = vld [vmem:[%s10] sm:$0xff]
  %v676 = vld [vmem:[%s10 + $0x8] sm:$0xff]
  %v677 = vld [vmem:[%s10 + $0x10] sm:$0xff]
  %v678 = vld [vmem:[%s10 + $0x18] sm:$0xff]
  %v679 = vld [vmem:[%s11] sm:$0xff]
  %v680 = vld [vmem:[%s11 + $0x8] sm:$0xff]
  %v681 = vld [vmem:[%s11 + $0x10] sm:$0xff]
  %v682 = vld [vmem:[%s11 + $0x18] sm:$0xff]
  %684 = vset.pattern.permute.xlu0 0
  %685 = vperm.xlu0 %684, %v679
  %v686 = vpop.permute.xlu0 %685
  %689 = vset.pattern.permute.xlu0 0
  %690 = vperm.xlu0 %689, %v680
  %v691 = vpop.permute.xlu0 %690
  %694 = vset.pattern.permute.xlu0 0
  %695 = vperm.xlu0 %694, %v681
  %v696 = vpop.permute.xlu0 %695
  %699 = vset.pattern.permute.xlu0 0
  %700 = vperm.xlu0 %699, %v682
  %v701 = vpop.permute.xlu0 %700
  %v704 = vsel %vm293, %v675, 0
  %v707 = vsel %vm293, %v676, 0
  %v710 = vsel %vm293, %v677, 0
  %v713 = vsel %vm293, %v678, 0
  %715 = vmatprep.subr.mxu0 0.0
  %716 = vmatpush1.msra.mxu0 %v671
  %717 = vmatprep.subr.mxu0 0.0
  %718 = vmatpush1.msra.mxu0 %v672
  %719 = vmatprep.subr.mxu0 0.0
  %720 = vmatpush1.msra.mxu0 %v673
  %721 = vmatprep.subr.mxu0 0.0
  %722 = vmatpush1.msra.mxu0 %v674
  %723 = vmatprep.subr.mxu0 0.0
  %724 = vmatpush1.msra.mxu0 0.0
  %725 = vmatprep.subr.mxu0 0.0
  %726 = vmatpush1.msra.mxu0 0.0
  %727 = vmatprep.subr.mxu0 0.0
  %728 = vmatpush1.msra.mxu0 0.0
  %729 = vmatprep.subr.mxu0 0.0
  %730 = vmatpush1.msra.mxu0 0.0
  %731 = vmatprep.subr.mxu0 0.0
  %732 = vmatpush1.msra.mxu0 0.0
  %733 = vmatprep.subr.mxu0 0.0
  %734 = vmatpush1.msra.mxu0 0.0
  %735 = vmatprep.subr.mxu0 0.0
  %736 = vmatpush1.msra.mxu0 0.0
  %737 = vmatprep.subr.mxu0 0.0
  %738 = vmatpush1.msra.mxu0 0.0
  %739 = vmatprep.subr.mxu0 0.0
  %740 = vmatpush1.msra.mxu0 0.0
  %741 = vmatprep.subr.mxu0 0.0
  %742 = vmatpush1.msra.mxu0 0.0
  %743 = vmatprep.subr.mxu0 0.0
  %744 = vmatpush1.msra.mxu0 0.0
  %745 = vmatprep.subr.mxu0 0.0
  %746 = vmatpush1.msra.mxu0 0.0
  %747 = vmatprep.subr.mxu0 0.0
  %748 = vmatpush1.msra.mxu0 0.0
  %749 = vmatprep.subr.mxu0 0.0
  %750 = vmatpush1.msra.mxu0 0.0
  %751 = vmatprep.subr.mxu0 0.0
  %752 = vmatpush1.msra.mxu0 0.0
  %753 = vmatprep.subr.mxu0 0.0
  %754 = vmatpush1.msra.mxu0 0.0
  %755 = vmatprep.subr.mxu0 0.0
  %756 = vmatpush1.msra.mxu0 0.0
  %757 = vmatprep.subr.mxu0 0.0
  %758 = vmatpush1.msra.mxu0 0.0
  %759 = vmatprep.subr.mxu0 0.0
  %760 = vmatpush1.msra.mxu0 0.0
  %761 = vmatprep.subr.mxu0 0.0
  %762 = vmatpush1.msra.mxu0 0.0
  %763 = vmatprep.subr.mxu0 0.0
  %764 = vmatpush1.msra.mxu0 0.0
  %765 = vmatprep.subr.mxu0 0.0
  %766 = vmatpush1.msra.mxu0 0.0
  %767 = vmatprep.subr.mxu0 0.0
  %768 = vmatpush1.msra.mxu0 0.0
  %769 = vmatprep.subr.mxu0 0.0
  %770 = vmatpush1.msra.mxu0 0.0
  %771 = vmatprep.subr.mxu0 0.0
  %772 = vmatpush1.msra.mxu0 0.0
  %773 = vmatprep.subr.mxu0 0.0
  %774 = vmatpush1.msra.mxu0 0.0
  %775 = vmatprep.subr.mxu0 0.0
  %776 = vmatpush1.msra.mxu0 0.0
  %777 = vmatprep.subr.mxu0 0.0
  %778 = vmatpush1.msra.mxu0 0.0
  %779 = vmatprep.mubr.f32.mxu0 0.0
  %780 = vmatmul.mubr.f32.gmra.mrb[0].mxu0 %v704
  %v781 = vpop.f32.mrb[0].mxu0
  %v782 = vadd.f32 %v686, %v781
  %v783 = vpop.f32.mrb[0].mxu0
  %784 = vmatprep.mubr.f32.mxu0 0.0
  %785 = vmatmul.mubr.f32.gmra.mrb[0].mxu0 %v707
  %v786 = vpop.f32.mrb[0].mxu0
  %v787 = vadd.f32 %v691, %v786
  %v788 = vpop.f32.mrb[0].mxu0
  %789 = vmatprep.mubr.f32.mxu0 0.0
  %790 = vmatmul.mubr.f32.gmra.mrb[0].mxu0 %v710
  %v791 = vpop.f32.mrb[0].mxu0
  %v792 = vadd.f32 %v696, %v791
  %v793 = vpop.f32.mrb[0].mxu0
  %794 = vmatprep.mubr.f32.mxu0 0.0
  %795 = vmatmul.mubr.f32.gmra.mrb[0].mxu0 %v713
  %v796 = vpop.f32.mrb[0].mxu0
  %v797 = vadd.f32 %v701, %v796
  %v798 = vpop.f32.mrb[0].mxu0
  %799 = vdwg.mxu0
  %v800 = vmax.f32 %v782, 0.0
  %v801 = vmax.f32 %v787, 0.0
  %v802 = vmax.f32 %v792, 0.0
  %v803 = vmax.f32 %v797, 0.0
  %v804 = vld [vmem:[%s12] sm:$0x1]
  %v805 = vld [vmem:[#allocation3] sm:$0x1]
  %807 = vset.pattern.permute.xlu0 0
  %808 = vperm.xlu0 %807, %v805
  %v809 = vpop.permute.xlu0 %808
  %v811 = vlaneseq
  %v812 = vshrl.u32 %v811, 7
  %v813 = vsub.s32 0, %v812
  %v814 = vrot.slane %v809, %v813
  %v816 = vsel %vm293, %v804, 0
  %818 = vmatprep.subr.mxu0 0.0
  %819 = vmatpush1.msra.mxu0 %v800
  %820 = vmatprep.subr.mxu0 0.0
  %821 = vmatpush1.msra.mxu0 %v801
  %822 = vmatprep.subr.mxu0 0.0
  %823 = vmatpush1.msra.mxu0 %v802
  %824 = vmatprep.subr.mxu0 0.0
  %825 = vmatpush1.msra.mxu0 %v803
  %826 = vmatprep.subr.mxu0 0.0
  %827 = vmatpush1.msra.mxu0 0.0
  %828 = vmatprep.subr.mxu0 0.0
  %829 = vmatpush1.msra.mxu0 0.0
  %830 = vmatprep.subr.mxu0 0.0
  %831 = vmatpush1.msra.mxu0 0.0
  %832 = vmatprep.subr.mxu0 0.0
  %833 = vmatpush1.msra.mxu0 0.0
  %834 = vmatprep.subr.mxu0 0.0
  %835 = vmatpush1.msra.mxu0 0.0
  %836 = vmatprep.subr.mxu0 0.0
  %837 = vmatpush1.msra.mxu0 0.0
  %838 = vmatprep.subr.mxu0 0.0
  %839 = vmatpush1.msra.mxu0 0.0
  %840 = vmatprep.subr.mxu0 0.0
  %841 = vmatpush1.msra.mxu0 0.0
  %842 = vmatprep.subr.mxu0 0.0
  %843 = vmatpush1.msra.mxu0 0.0
  %844 = vmatprep.subr.mxu0 0.0
  %845 = vmatpush1.msra.mxu0 0.0
  %846 = vmatprep.subr.mxu0 0.0
  %847 = vmatpush1.msra.mxu0 0.0
  %848 = vmatprep.subr.mxu0 0.0
  %849 = vmatpush1.msra.mxu0 0.0
  %850 = vmatprep.subr.mxu0 0.0
  %851 = vmatpush1.msra.mxu0 0.0
  %852 = vmatprep.subr.mxu0 0.0
  %853 = vmatpush1.msra.mxu0 0.0
  %854 = vmatprep.subr.mxu0 0.0
  %855 = vmatpush1.msra.mxu0 0.0
  %856 = vmatprep.subr.mxu0 0.0
  %857 = vmatpush1.msra.mxu0 0.0
  %858 = vmatprep.subr.mxu0 0.0
  %859 = vmatpush1.msra.mxu0 0.0
  %860 = vmatprep.subr.mxu0 0.0
  %861 = vmatpush1.msra.mxu0 0.0
  %862 = vmatprep.subr.mxu0 0.0
  %863 = vmatpush1.msra.mxu0 0.0
  %864 = vmatprep.subr.mxu0 0.0
  %865 = vmatpush1.msra.mxu0 0.0
  %866 = vmatprep.subr.mxu0 0.0
  %867 = vmatpush1.msra.mxu0 0.0
  %868 = vmatprep.subr.mxu0 0.0
  %869 = vmatpush1.msra.mxu0 0.0
  %870 = vmatprep.subr.mxu0 0.0
  %871 = vmatpush1.msra.mxu0 0.0
  %872 = vmatprep.subr.mxu0 0.0
  %873 = vmatpush1.msra.mxu0 0.0
  %874 = vmatprep.subr.mxu0 0.0
  %875 = vmatpush1.msra.mxu0 0.0
  %876 = vmatprep.subr.mxu0 0.0
  %877 = vmatpush1.msra.mxu0 0.0
  %878 = vmatprep.subr.mxu0 0.0
  %879 = vmatpush1.msra.mxu0 0.0
  %880 = vmatprep.subr.mxu0 0.0
  %881 = vmatpush1.msra.mxu0 0.0
  %882 = vmatprep.mubr.f32.mxu0 0.0
  %883 = vmatmul.mubr.f32.gmra.mrb[0].mxu0 %v816
  %v884 = vpop.f32.mrb[0].mxu0
  %v885 = vadd.f32 %v814, %v884
  %v886 = vpop.f32.mrb[0].mxu0
  %887 = vdwg.mxu0
  %v888 = vld [vmem:[%s15] sm:$0xff]
  %v889 = vld [vmem:[%s15 + $0x8] sm:$0xff]
  %v890 = vld [vmem:[%s15 + $0x10] sm:$0xff]
  %v891 = vld [vmem:[%s15 + $0x18] sm:$0xff]
  %v892 = vld [vmem:[%s15 + $0x20] sm:$0xff]
  %v893 = vld [vmem:[%s15 + $0x28] sm:$0xff]
  %v894 = vld [vmem:[%s15 + $0x30] sm:$0xff]
  %v895 = vld [vmem:[%s15 + $0x38] sm:$0xff]
  %v896 = vld [vmem:[%s15 + $0x40] sm:$0xff]
  %v897 = vld [vmem:[%s15 + $0x48] sm:$0xff]
  %v898 = vld [vmem:[%s15 + $0x50] sm:$0xff]
  %v899 = vld [vmem:[%s15 + $0x58] sm:$0xff]
  %v900 = vld [vmem:[%s15 + $0x60] sm:$0xff]
  %v901 = vld [vmem:[%s15 + $0x68] sm:$0xff]
  %v902 = vld [vmem:[%s15 + $0x70] sm:$0xff]
  %v903 = vld [vmem:[%s15 + $0x78] sm:$0xff]
  %v904 = vld [vmem:[%s15 + $0x80] sm:$0xff]
  %v905 = vld [vmem:[%s15 + $0x88] sm:$0xff]
  %v906 = vld [vmem:[%s15 + $0x90] sm:$0xff]
  %v907 = vld [vmem:[%s15 + $0x98] sm:$0xff]
  %v908 = vld [vmem:[%s15 + $0xa0] sm:$0xff]
  %v909 = vld [vmem:[%s15 + $0xa8] sm:$0xff]
  %v910 = vld [vmem:[%s15 + $0xb0] sm:$0xff]
  %v911 = vld [vmem:[%s15 + $0xb8] sm:$0xff]
  %v912 = vld [vmem:[%s15 + $0xc0] sm:$0xff]
  %v913 = vld [vmem:[%s15 + $0xc8] sm:$0xff]
  %v914 = vld [vmem:[%s15 + $0xd0] sm:$0xff]
  %v915 = vld [vmem:[%s15 + $0xd8] sm:$0xff]
  %v917 = vsel %vm293, %v885, 0
  %919 = vmatprep.subr.mxu0 %v889
  %920 = vmatpush1.msra.mxu0 %v888
  %921 = vmatprep.subr.mxu0 %v896
  %922 = vmatpush1.msra.mxu0 %v895
  %923 = vmatprep.subr.mxu0 %v903
  %924 = vmatpush1.msra.mxu0 %v902
  %925 = vmatprep.subr.mxu0 %v910
  %926 = vmatpush1.msra.mxu0 %v909
  %927 = vmatprep.subr.mxu0 0.0
  %928 = vmatpush1.msra.mxu0 0.0
  %929 = vmatprep.subr.mxu0 0.0
  %930 = vmatpush1.msra.mxu0 0.0
  %931 = vmatprep.subr.mxu0 0.0
  %932 = vmatpush1.msra.mxu0 0.0
  %933 = vmatprep.subr.mxu0 0.0
  %934 = vmatpush1.msra.mxu0 0.0
  %935 = vmatprep.subr.mxu0 0.0
  %936 = vmatpush1.msra.mxu0 0.0
  %937 = vmatprep.subr.mxu0 0.0
  %938 = vmatpush1.msra.mxu0 0.0
  %939 = vmatprep.subr.mxu0 0.0
  %940 = vmatpush1.msra.mxu0 0.0
  %941 = vmatprep.subr.mxu0 0.0
  %942 = vmatpush1.msra.mxu0 0.0
  %943 = vmatprep.subr.mxu0 0.0
  %944 = vmatpush1.msra.mxu0 0.0
  %945 = vmatprep.subr.mxu0 0.0
  %946 = vmatpush1.msra.mxu0 0.0
  %947 = vmatprep.subr.mxu0 0.0
  %948 = vmatpush1.msra.mxu0 0.0
  %949 = vmatprep.subr.mxu0 0.0
  %950 = vmatpush1.msra.mxu0 0.0
  %951 = vmatprep.subr.mxu0 0.0
  %952 = vmatpush1.msra.mxu0 0.0
  %953 = vmatprep.subr.mxu0 0.0
  %954 = vmatpush1.msra.mxu0 0.0
  %955 = vmatprep.subr.mxu0 0.0
  %956 = vmatpush1.msra.mxu0 0.0
  %957 = vmatprep.subr.mxu0 0.0
  %958 = vmatpush1.msra.mxu0 0.0
  %959 = vmatprep.subr.mxu0 0.0
  %960 = vmatpush1.msra.mxu0 0.0
  %961 = vmatprep.subr.mxu0 0.0
  %962 = vmatpush1.msra.mxu0 0.0
  %963 = vmatprep.subr.mxu0 0.0
  %964 = vmatpush1.msra.mxu0 0.0
  %965 = vmatprep.subr.mxu0 0.0
  %966 = vmatpush1.msra.mxu0 0.0
  %967 = vmatprep.subr.mxu0 0.0
  %968 = vmatpush1.msra.mxu0 0.0
  %969 = vmatprep.subr.mxu0 0.0
  %970 = vmatpush1.msra.mxu0 0.0
  %971 = vmatprep.subr.mxu0 0.0
  %972 = vmatpush1.msra.mxu0 0.0
  %973 = vmatprep.subr.mxu0 0.0
  %974 = vmatpush1.msra.mxu0 0.0
  %975 = vmatprep.subr.mxu0 0.0
  %976 = vmatpush1.msra.mxu0 0.0
  %977 = vmatprep.subr.mxu0 0.0
  %978 = vmatpush1.msra.mxu0 0.0
  %979 = vmatprep.subr.mxu0 0.0
  %980 = vmatpush1.msra.mxu0 0.0
  %981 = vmatprep.subr.mxu0 0.0
  %982 = vmatpush1.msra.mxu0 0.0
  %983 = vmatprep.mubr.f32.mxu0 0.0
  %984 = vmatmul.mubr.f32.gmra.mrb[0].mxu0 %v917
  %v985 = vpop.f32.mrb[0].mxu0
  %v986 = vadd.f32 0.0, %v985
  %v987 = vpop.f32.mrb[0].mxu0
  %v988 = vadd.f32 0.0, %v987
  %989 = vdwg.mxu0
  %990 = vmatprep.subr.mxu0 %v891
  %991 = vmatpush1.msra.mxu0 %v890
  %992 = vmatprep.subr.mxu0 %v898
  %993 = vmatpush1.msra.mxu0 %v897
  %994 = vmatprep.subr.mxu0 %v905
  %995 = vmatpush1.msra.mxu0 %v904
  %996 = vmatprep.subr.mxu0 %v912
  %997 = vmatpush1.msra.mxu0 %v911
  %998 = vmatprep.subr.mxu0 0.0
  %999 = vmatpush1.msra.mxu0 0.0
  %1000 = vmatprep.subr.mxu0 0.0
  %1001 = vmatpush1.msra.mxu0 0.0
  %1002 = vmatprep.subr.mxu0 0.0
  %1003 = vmatpush1.msra.mxu0 0.0
  %1004 = vmatprep.subr.mxu0 0.0
  %1005 = vmatpush1.msra.mxu0 0.0
  %1006 = vmatprep.subr.mxu0 0.0
  %1007 = vmatpush1.msra.mxu0 0.0
  %1008 = vmatprep.subr.mxu0 0.0
  %1009 = vmatpush1.msra.mxu0 0.0
  %1010 = vmatprep.subr.mxu0 0.0
  %1011 = vmatpush1.msra.mxu0 0.0
  %1012 = vmatprep.subr.mxu0 0.0
  %1013 = vmatpush1.msra.mxu0 0.0
  %1014 = vmatprep.subr.mxu0 0.0
  %1015 = vmatpush1.msra.mxu0 0.0
  %1016 = vmatprep.subr.mxu0 0.0
  %1017 = vmatpush1.msra.mxu0 0.0
  %1018 = vmatprep.subr.mxu0 0.0
  %1019 = vmatpush1.msra.mxu0 0.0
  %1020 = vmatprep.subr.mxu0 0.0
  %1021 = vmatpush1.msra.mxu0 0.0
  %1022 = vmatprep.subr.mxu0 0.0
  %1023 = vmatpush1.msra.mxu0 0.0
  %1024 = vmatprep.subr.mxu0 0.0
  %1025 = vmatpush1.msra.mxu0 0.0
  %1026 = vmatprep.subr.mxu0 0.0
  %1027 = vmatpush1.msra.mxu0 0.0
  %1028 = vmatprep.subr.mxu0 0.0
  %1029 = vmatpush1.msra.mxu0 0.0
  %1030 = vmatprep.subr.mxu0 0.0
  %1031 = vmatpush1.msra.mxu0 0.0
  %1032 = vmatprep.subr.mxu0 0.0
  %1033 = vmatpush1.msra.mxu0 0.0
  %1034 = vmatprep.subr.mxu0 0.0
  %1035 = vmatpush1.msra.mxu0 0.0
  %1036 = vmatprep.subr.mxu0 0.0
  %1037 = vmatpush1.msra.mxu0 0.0
  %1038 = vmatprep.subr.mxu0 0.0
  %1039 = vmatpush1.msra.mxu0 0.0
  %1040 = vmatprep.subr.mxu0 0.0
  %1041 = vmatpush1.msra.mxu0 0.0
  %1042 = vmatprep.subr.mxu0 0.0
  %1043 = vmatpush1.msra.mxu0 0.0
  %1044 = vmatprep.subr.mxu0 0.0
  %1045 = vmatpush1.msra.mxu0 0.0
  %1046 = vmatprep.subr.mxu0 0.0
  %1047 = vmatpush1.msra.mxu0 0.0
  %1048 = vmatprep.subr.mxu0 0.0
  %1049 = vmatpush1.msra.mxu0 0.0
  %1050 = vmatprep.subr.mxu0 0.0
  %1051 = vmatpush1.msra.mxu0 0.0
  %1052 = vmatprep.subr.mxu0 0.0
  %1053 = vmatpush1.msra.mxu0 0.0
  %1054 = vmatprep.mubr.f32.mxu0 0.0
  %1055 = vmatmul.mubr.f32.gmra.mrb[0].mxu0 %v917
  %v1056 = vpop.f32.mrb[0].mxu0
  %v1057 = vadd.f32 0.0, %v1056
  %v1058 = vpop.f32.mrb[0].mxu0
  %v1059 = vadd.f32 0.0, %v1058
  %1060 = vdwg.mxu0
  %1061 = vmatprep.subr.mxu0 %v893
  %1062 = vmatpush1.msra.mxu0 %v892
  %1063 = vmatprep.subr.mxu0 %v900
  %1064 = vmatpush1.msra.mxu0 %v899
  %1065 = vmatprep.subr.mxu0 %v907
  %1066 = vmatpush1.msra.mxu0 %v906
  %1067 = vmatprep.subr.mxu0 %v914
  %1068 = vmatpush1.msra.mxu0 %v913
  %1069 = vmatprep.subr.mxu0 0.0
  %1070 = vmatpush1.msra.mxu0 0.0
  %1071 = vmatprep.subr.mxu0 0.0
  %1072 = vmatpush1.msra.mxu0 0.0
  %1073 = vmatprep.subr.mxu0 0.0
  %1074 = vmatpush1.msra.mxu0 0.0
  %1075 = vmatprep.subr.mxu0 0.0
  %1076 = vmatpush1.msra.mxu0 0.0
  %1077 = vmatprep.subr.mxu0 0.0
  %1078 = vmatpush1.msra.mxu0 0.0
  %1079 = vmatprep.subr.mxu0 0.0
  %1080 = vmatpush1.msra.mxu0 0.0
  %1081 = vmatprep.subr.mxu0 0.0
  %1082 = vmatpush1.msra.mxu0 0.0
  %1083 = vmatprep.subr.mxu0 0.0
  %1084 = vmatpush1.msra.mxu0 0.0
  %1085 = vmatprep.subr.mxu0 0.0
  %1086 = vmatpush1.msra.mxu0 0.0
  %1087 = vmatprep.subr.mxu0 0.0
  %1088 = vmatpush1.msra.mxu0 0.0
  %1089 = vmatprep.subr.mxu0 0.0
  %1090 = vmatpush1.msra.mxu0 0.0
  %1091 = vmatprep.subr.mxu0 0.0
  %1092 = vmatpush1.msra.mxu0 0.0
  %1093 = vmatprep.subr.mxu0 0.0
  %1094 = vmatpush1.msra.mxu0 0.0
  %1095 = vmatprep.subr.mxu0 0.0
  %1096 = vmatpush1.msra.mxu0 0.0
  %1097 = vmatprep.subr.mxu0 0.0
  %1098 = vmatpush1.msra.mxu0 0.0
  %1099 = vmatprep.subr.mxu0 0.0
  %1100 = vmatpush1.msra.mxu0 0.0
  %1101 = vmatprep.subr.mxu0 0.0
  %1102 = vmatpush1.msra.mxu0 0.0
  %1103 = vmatprep.subr.mxu0 0.0
  %1104 = vmatpush1.msra.mxu0 0.0
  %1105 = vmatprep.subr.mxu0 0.0
  %1106 = vmatpush1.msra.mxu0 0.0
  %1107 = vmatprep.subr.mxu0 0.0
  %1108 = vmatpush1.msra.mxu0 0.0
  %1109 = vmatprep.subr.mxu0 0.0
  %1110 = vmatpush1.msra.mxu0 0.0
  %1111 = vmatprep.subr.mxu0 0.0
  %1112 = vmatpush1.msra.mxu0 0.0
  %1113 = vmatprep.subr.mxu0 0.0
  %1114 = vmatpush1.msra.mxu0 0.0
  %1115 = vmatprep.subr.mxu0 0.0
  %1116 = vmatpush1.msra.mxu0 0.0
  %1117 = vmatprep.subr.mxu0 0.0
  %1118 = vmatpush1.msra.mxu0 0.0
  %1119 = vmatprep.subr.mxu0 0.0
  %1120 = vmatpush1.msra.mxu0 0.0
  %1121 = vmatprep.subr.mxu0 0.0
  %1122 = vmatpush1.msra.mxu0 0.0
  %1123 = vmatprep.subr.mxu0 0.0
  %1124 = vmatpush1.msra.mxu0 0.0
  %1125 = vmatprep.mubr.f32.mxu0 0.0
  %1126 = vmatmul.mubr.f32.gmra.mrb[0].mxu0 %v917
  %v1127 = vpop.f32.mrb[0].mxu0
  %v1128 = vadd.f32 0.0, %v1127
  %v1129 = vpop.f32.mrb[0].mxu0
  %v1130 = vadd.f32 0.0, %v1129
  %1131 = vdwg.mxu0
  %1132 = vmatprep.subr.mxu0 0.0
  %1133 = vmatpush1.msra.mxu0 %v894
  %1134 = vmatprep.subr.mxu0 0.0
  %1135 = vmatpush1.msra.mxu0 %v901
  %1136 = vmatprep.subr.mxu0 0.0
  %1137 = vmatpush1.msra.mxu0 %v908
  %1138 = vmatprep.subr.mxu0 0.0
  %1139 = vmatpush1.msra.mxu0 %v915
  %1140 = vmatprep.subr.mxu0 0.0
  %1141 = vmatpush1.msra.mxu0 0.0
  %1142 = vmatprep.subr.mxu0 0.0
  %1143 = vmatpush1.msra.mxu0 0.0
  %1144 = vmatprep.subr.mxu0 0.0
  %1145 = vmatpush1.msra.mxu0 0.0
  %1146 = vmatprep.subr.mxu0 0.0
  %1147 = vmatpush1.msra.mxu0 0.0
  %1148 = vmatprep.subr.mxu0 0.0
  %1149 = vmatpush1.msra.mxu0 0.0
  %1150 = vmatprep.subr.mxu0 0.0
  %1151 = vmatpush1.msra.mxu0 0.0
  %1152 = vmatprep.subr.mxu0 0.0
  %1153 = vmatpush1.msra.mxu0 0.0
  %1154 = vmatprep.subr.mxu0 0.0
  %1155 = vmatpush1.msra.mxu0 0.0
  %1156 = vmatprep.subr.mxu0 0.0
  %1157 = vmatpush1.msra.mxu0 0.0
  %1158 = vmatprep.subr.mxu0 0.0
  %1159 = vmatpush1.msra.mxu0 0.0
  %1160 = vmatprep.subr.mxu0 0.0
  %1161 = vmatpush1.msra.mxu0 0.0
  %1162 = vmatprep.subr.mxu0 0.0
  %1163 = vmatpush1.msra.mxu0 0.0
  %1164 = vmatprep.subr.mxu0 0.0
  %1165 = vmatpush1.msra.mxu0 0.0
  %1166 = vmatprep.subr.mxu0 0.0
  %1167 = vmatpush1.msra.mxu0 0.0
  %1168 = vmatprep.subr.mxu0 0.0
  %1169 = vmatpush1.msra.mxu0 0.0
  %1170 = vmatprep.subr.mxu0 0.0
  %1171 = vmatpush1.msra.mxu0 0.0
  %1172 = vmatprep.subr.mxu0 0.0
  %1173 = vmatpush1.msra.mxu0 0.0
  %1174 = vmatprep.subr.mxu0 0.0
  %1175 = vmatpush1.msra.mxu0 0.0
  %1176 = vmatprep.subr.mxu0 0.0
  %1177 = vmatpush1.msra.mxu0 0.0
  %1178 = vmatprep.subr.mxu0 0.0
  %1179 = vmatpush1.msra.mxu0 0.0
  %1180 = vmatprep.subr.mxu0 0.0
  %1181 = vmatpush1.msra.mxu0 0.0
  %1182 = vmatprep.subr.mxu0 0.0
  %1183 = vmatpush1.msra.mxu0 0.0
  %1184 = vmatprep.subr.mxu0 0.0
  %1185 = vmatpush1.msra.mxu0 0.0
  %1186 = vmatprep.subr.mxu0 0.0
  %1187 = vmatpush1.msra.mxu0 0.0
  %1188 = vmatprep.subr.mxu0 0.0
  %1189 = vmatpush1.msra.mxu0 0.0
  %1190 = vmatprep.subr.mxu0 0.0
  %1191 = vmatpush1.msra.mxu0 0.0
  %1192 = vmatprep.subr.mxu0 0.0
  %1193 = vmatpush1.msra.mxu0 0.0
  %1194 = vmatprep.subr.mxu0 0.0
  %1195 = vmatpush1.msra.mxu0 0.0
  %1196 = vmatprep.mubr.f32.mxu0 0.0
  %1197 = vmatmul.mubr.f32.gmra.mrb[0].mxu0 %v917
  %v1198 = vpop.f32.mrb[0].mxu0
  %v1199 = vadd.f32 0.0, %v1198
  %v1200 = vpop.f32.mrb[0].mxu0
  %1201 = vdwg.mxu0
  %v1209 = vcombine.low %v986, %v988
  %v1210 = vcombine.low %v1057, %v1059
  %v1211 = vcombine.low %v1128, %v1130
  %v1213 = vunpack.c.l.s4 1966171168
  %v1214 = vunpack.c.0.s8 %v1213
  %v1215 = vlaneseq
  %v1216 = vshrl.u32 %v1215, 7
  %v1217 = vsub.s32 %v1214, %v1216
  %v1218 = vrot.slane %v1209, %v1217
  %v1220 = vunpack.c.l.s4 1966171168
  %v1221 = vunpack.c.0.s8 %v1220
  %v1222 = vlaneseq
  %v1223 = vshrl.u32 %v1222, 7
  %v1224 = vsub.s32 %v1221, %v1223
  %v1225 = vrot.slane %v1210, %v1224
  %v1227 = vunpack.c.l.s4 1966171168
  %v1228 = vunpack.c.0.s8 %v1227
  %v1229 = vlaneseq
  %v1230 = vshrl.u32 %v1229, 7
  %v1231 = vsub.s32 %v1228, %v1230
  %v1232 = vrot.slane %v1211, %v1231
  %v1234 = vunpack.c.l.s4 1966171168
  %v1235 = vunpack.c.0.s8 %v1234
  %v1236 = vlaneseq
  %v1237 = vshrl.u32 %v1236, 7
  %v1238 = vsub.s32 %v1235, %v1237
  %v1239 = vrot.slane %v1199, %v1238
  %v1240 = vcombine.low %v1218, %v1225
  %v1241 = vcombine.low %v1232, %v1239
  %v1243 = vunpack.c.l.s4 1966171168
  %v1244 = vunpack.c.0.s8 %v1243
  %v1245 = vlaneseq
  %v1246 = vshrl.u32 %v1245, 7
  %v1247 = vsub.s32 %v1244, %v1246
  %v1248 = vrot.slane %v1240, %v1247
  %v1250 = vunpack.c.l.s4 1966171168
  %v1251 = vunpack.c.0.s8 %v1250
  %v1252 = vlaneseq
  %v1253 = vshrl.u32 %v1252, 7
  %v1254 = vsub.s32 %v1251, %v1253
  %v1255 = vrot.slane %v1241, %v1254
  %v1256 = vcombine.low %v1248, %v1255
  %vm1258 = vcmp.lt.s32.totalorder %v556, 896
  %vm1259 = vmand %vm557, %vm1258
  %1260 = vst.msk [vmem:[%s16 + $0x1] sm:$0x7f] %vm1259, %v1256
  // Predicated region
  $region66: #{_sam_forward.1} parent=0 // pred_check
    _
  $region67: #{_sam_forward.1} parent=0 // pred_check_branch
    %1262 = sbr.rel (0) target = $region69
  $region68: #{_sam_forward.1} parent=0 // pred_region
    _
  $region69: #{_sam_forward.1} parent=0 // pred_fallthru
    _
  // Predicated region
  $region70: #{_sam_forward.1} parent=0 // pred_check
    _
  $region71: #{_sam_forward.1} parent=0 // pred_check_branch
    %1264 = sbr.rel (0) target = $region73
  $region72: #{_sam_forward.1} parent=0 // pred_region
    _
  $region73: #{_sam_forward.1} parent=0 // pred_fallthru
    _

</llo_original>
